<compile_context>
chip_gen: v7x
topology: tpu7x:2x2x1
jax: 0.10.0
libtpu: 0.0.40
codegen_flags: <defaults>
</compile_context>

<pallas_src>
import jax
import jax.numpy as jnp
import numpy as np
from jax.experimental import pallas as pl
from jax.experimental.pallas import tpu as pltpu


# Below this many input bytes, per-step pipeline overhead (~0.35 us/step)
# dominates: use a single un-tiled grid step.
_SINGLE_STEP_MAX_BYTES = 2 * 1024 * 1024
# Per-block input budget for the tiled path.  2x (double buffering) plus the
# two (tb, C) f32 accumulators stays well under v5e's 16 MiB default scoped
# VMEM and v7x's 32 MiB scoped limit.
_TILE_INPUT_BUDGET_BYTES = 4 * 1024 * 1024


# ----------------------------------------------------------------------------
# Kernels
# ----------------------------------------------------------------------------
def _single_step_kernel(td_ref, out_ref):
    # td_ref:  (B, T, C) -- whole array resident in VMEM (grid=()).
    # out_ref: (B, C)
    x = td_ref[...]
    num = jnp.sum(x * x, axis=1, dtype=jnp.float32)        # (B, C), f32 accumulation
    den = jnp.sum(x, axis=1, dtype=jnp.float32)            # (B, C)
    out_ref[...] = (num * pl.reciprocal(den, approx=False)).astype(out_ref.dtype)


def _tiled_kernel(td_ref, out_ref, num_acc, den_acc):
    # td_ref:  (tb, tt, C) input block
    # out_ref: (tb, C)     output block (same block across the T grid axis)
    # num_acc/den_acc: (tb, C) f32 VMEM scratch accumulators
    t = pl.program_id(1)

    @pl.when(t == 0)
    def _init():
        num_acc[...] = jnp.zeros_like(num_acc)
        den_acc[...] = jnp.zeros_like(den_acc)

    x = td_ref[...]
    # No materialized f32 copy of the block: multiply in the input dtype,
    # accumulate the sublane-axis reduction in f32.
    num_acc[...] += jnp.sum(x * x, axis=1, dtype=jnp.float32)
    den_acc[...] += jnp.sum(x, axis=1, dtype=jnp.float32)

    @pl.when(t == pl.num_programs(1) - 1)
    def _finalize():
        out_ref[...] = (num_acc[...] *
                        pl.reciprocal(den_acc[...], approx=False)).astype(out_ref.dtype)


# ----------------------------------------------------------------------------
# Wrapper
# ----------------------------------------------------------------------------
def _choose_tiles(B, T, C, itemsize):
    """Pick (tb, tt) that satisfy (8,128)-layout rules and the VMEM budget.

    Returns None if no clean tiling exists (caller falls back to the
    single-step kernel)."""
    # tb: sublane dim of the (tb, C) output / accumulator. Multiple of 8
    # avoids masked partial stores on the finalize step; tb == B (full dim)
    # is always layout-legal for small / odd batch sizes.
    if B % 8 == 0:
        tb = 8          # small tb -> more B grid steps -> better megacore sharding
    else:
        tb = B
    # tt: sublane dim of the (tb, tt, C) input block; must be a multiple of 8
    # (or the full T).  Pick the largest divisor of T under the VMEM budget.
    per_row_bytes = tb * C * itemsize
    max_tt = max(8, _TILE_INPUT_BUDGET_BYTES // max(per_row_bytes, 1))
    best_tt = None
    for tt in range(8, T + 1, 8):
        if T % tt == 0 and tt <= max_tt:
            best_tt = tt
    if best_tt is None:
        # TODO(synk): pad T (and/or B) up to a tileable size instead of
        # falling back to the single-step path for awkward shapes.
        return None
    return tb, best_tt


def linear_soft_pool(logits, time_decision, pooldim=1, *, force_tiled=False):
    """Pallas implementation of LinearSoftPool.forward.

    logits:        unused (kept for parity with the torch signature)
    time_decision: (B, T, C) per-frame decisions (f32 or bf16)
    returns:       (B, C)
    """
    del logits  # unused in the reference forward
    assert pooldim == 1, "kernel specialized for pooldim=1 (the module default)"
    B, T, C = time_decision.shape
    dtype = time_decision.dtype
    itemsize = jnp.dtype(dtype).itemsize
    nbytes = B * T * C * itemsize

    # TODO(synk): if C is not a multiple of 128 (e.g. 527 classes), pad C up
    # to the next multiple of 128 here and slice the result, to keep the
    # output store lane-dense.

    def _single_step():
        return pl.pallas_call(
            _single_step_kernel,
            out_shape=jax.ShapeDtypeStruct((B, C), dtype),
            in_specs=[pl.BlockSpec((B, T, C), lambda: (0, 0, 0))],
            out_specs=pl.BlockSpec((B, C), lambda: (0, 0)),
        )(time_decision)

    if not force_tiled and nbytes <= _SINGLE_STEP_MAX_BYTES:
        return _single_step()

    tiles = _choose_tiles(B, T, C, itemsize)
    if tiles is None:
        return _single_step()
    tb, tt = tiles

    grid = (B // tb, T // tt)
    return pl.pallas_call(
        _tiled_kernel,
        out_shape=jax.ShapeDtypeStruct((B, C), dtype),
        grid_spec=pltpu.PrefetchScalarGridSpec(
            num_scalar_prefetch=0,
            grid=grid,
            in_specs=[pl.BlockSpec((tb, tt, C), lambda b, t: (b, t, 0))],
            out_specs=pl.BlockSpec((tb, C), lambda b, t: (b, 0)),
            scratch_shapes=[pltpu.VMEM((tb, C), jnp.float32),
                            pltpu.VMEM((tb, C), jnp.float32)]),
        compiler_params=pltpu.CompilerParams(
            dimension_semantics=("parallel", "arbitrary")),
    )(time_decision)


def _reference_forward(logits, time_decision, pooldim=1):
    """Pure-JAX transcription of the torch forward for verification."""
    del logits
    return (jnp.sum(time_decision ** 2, axis=pooldim)
            / jnp.sum(time_decision, axis=pooldim))


# ----------------------------------------------------------------------------
# Self-test
# ----------------------------------------------------------------------------
if __name__ == "__main__":
    key = jax.random.PRNGKey(0)

    # --- Case 1: tiny input -> single-step path (launch overhead dominates) ---
    B, T, C = 4, 16, 128
    k_logits, k_dec, key = jax.random.split(key, 3)
    logits = jax.random.normal(k_logits, (B, T, C), jnp.float32)  # unused by forward
    # strictly positive so the denominator is well conditioned
    td = jax.random.uniform(k_dec, (B, T, C), jnp.float32, minval=0.05, maxval=1.0)

    out = jax.block_until_ready(linear_soft_pool(logits, td, pooldim=1))
    ref = _reference_forward(logits, td, pooldim=1)
    np.testing.assert_allclose(np.asarray(out), np.asarray(ref), rtol=1e-5, atol=1e-5)
    assert out.shape == (B, C)

    # --- Case 2: tiled (B-parallel x T-reduction) path, still small shapes ---
    B2, T2, C2 = 8, 64, 128
    k_logits2, k_dec2, key = jax.random.split(key, 3)
    logits2 = jax.random.normal(k_logits2, (B2, T2, C2), jnp.float32)
    td2 = jax.random.uniform(k_dec2, (B2, T2, C2), jnp.float32, minval=0.05, maxval=1.0)

    out2 = jax.block_until_ready(
        linear_soft_pool(logits2, td2, pooldim=1, force_tiled=True))
    ref2 = _reference_forward(logits2, td2, pooldim=1)
    np.testing.assert_allclose(np.asarray(out2), np.asarray(ref2), rtol=1e-5, atol=1e-5)
    assert out2.shape == (B2, C2)

    print("KERNEL_OK")
</pallas_src>

<mosaic_0001>
module attributes {stable_mosaic.version = 11 : i64} {
  func.func @_single_step_kernel(%arg0: memref<4x16x128xf32, #tpu.memory_space<vmem>>, %arg1: memref<4x128xf32, #tpu.memory_space<vmem>>) attributes {dimension_semantics = [], scalar_prefetch = 0 : i64, scratch_operands = 0 : i64, tpu.core_type = #tpu.core_type<tc>} {
    %c0 = arith.constant 0 : index
    %c0_0 = arith.constant 0 : index
    %c0_1 = arith.constant 0 : index
    %0 = vector.load %arg0[%c0, %c0_0, %c0_1] : memref<4x16x128xf32, #tpu.memory_space<vmem>>, vector<4x16x128xf32>
    %1 = arith.mulf %0, %0 : vector<4x16x128xf32>
    %cst = arith.constant dense<0.000000e+00> : vector<4x128xf32>
    %2 = vector.multi_reduction <add>, %1, %cst [1] : vector<4x16x128xf32> to vector<4x128xf32>
    %cst_2 = arith.constant dense<0.000000e+00> : vector<4x128xf32>
    %3 = vector.multi_reduction <add>, %0, %cst_2 [1] : vector<4x16x128xf32> to vector<4x128xf32>
    %4 = tpu.reciprocal %3 : vector<4x128xf32> -> vector<4x128xf32>
    %5 = arith.mulf %2, %4 : vector<4x128xf32>
    %c0_3 = arith.constant 0 : index
    %c0_4 = arith.constant 0 : index
    %6 = vector.load %arg1[%c0_3, %c0_4] : memref<4x128xf32, #tpu.memory_space<vmem>>, vector<4x128xf32>
    tpu.vector_store %arg1[%c0_3, %c0_4], %5 {strides = array<i32>} : memref<4x128xf32, #tpu.memory_space<vmem>>, vector<4x128xf32>,
    return
  }
}

</mosaic_0001>

<llo_original>
// kernel: tpu_custom_call.1
$region0: #{tpu_custom_call.1}
  #allocation0 [shape = 'u32[]', space=smem, size = 0x4, offset = 0x4, fixed_abs, tag = 'smem constant byte address 0x4 - core index']
  #allocation1 [shape = 'u32[144,128]{1,0:T(1,128)}', space=vmem, size = 0x12000, scoped, tag = 'internal scratch']
  %s0 = inlined_call_operand.hbm [shape: f32[4,16,128], index: 0, kind: input, shape index: {}]
  %s1 = inlined_call_operand.hbm [shape: f32[4,128], index: 1, kind: output, shape index: {}]
  %s2 = sld [smem:[#allocation0]]
  $region18: #{tpu_custom_call.1} parent=0
    _
  %s4 = ssub.s32 1, %s2
  %s5 = scalar_select 0, %s4, %s2
  $region1: #{tpu_custom_call.1} parent=0
    #allocation2 [shape = 'u8[32768]{0}', space=vmem, size = 0x8000, scoped, tag = 'input window, operand 0, single buffered']
    #allocation3 [shape = 's32[1]{0}', space=sflag, size = 0x4, scoped, tag = 'scoped memory for tpu_custom_call.1']
    #allocation4 [shape = 's32[1]{0}', space=sflag, size = 0x4, scoped, tag = 'scoped memory for tpu_custom_call.1']
    #allocation5 [shape = 'u8[2048]{0}', space=vmem, size = 0x800, scoped, tag = 'output window, operand 0, single buffered']
    %6 = vsyncpa [#allocation3], 0
    %7 = vsyncpa [#allocation4], 0
    // Predicated region
    $region2: #{tpu_custom_call.1} parent=1 // pred_check
      _
    $region3: #{tpu_custom_call.1} parent=1 // pred_check_branch
      %9 = sbr.rel (0) target = $region5
    $region4: #{tpu_custom_call.1} parent=1 // pred_region
      %s11 = ssub.s32 1024, 1024
      %12 = vsyncadd [#allocation3], %s11
      %s13 = sshll.u32 [#allocation2], 4
      %s14 = int_to_ptr.vmem [resolvable:$true] %s13
      %19 = dma.hbm_to_vmem [thread:$0]  %s0, 1024, %s14, [#allocation3], 128, 128, 8
    $region5: #{tpu_custom_call.1} parent=1 // pred_fallthru
      _
    // Predicated region
    $region6: #{tpu_custom_call.1} parent=1 // pred_check
      _
    $region7: #{tpu_custom_call.1} parent=1 // pred_check_branch
      %21 = sbr.rel (0) target = $region9
    $region8: #{tpu_custom_call.1} parent=1 // pred_region
      %22 = dma.done [#allocation3], 1024
    $region9: #{tpu_custom_call.1} parent=1 // pred_fallthru
      _
    %v23 = vld [vmem:[#allocation2] sm:$0xff]
    %v24 = vld [vmem:[#allocation2 + $0x8] sm:$0xff]
    %v25 = vld [vmem:[#allocation2 + $0x10] sm:$0xff]
    %v26 = vld [vmem:[#allocation2 + $0x18] sm:$0xff]
    %v27 = vld [vmem:[#allocation2 + $0x20] sm:$0xff]
    %v28 = vld [vmem:[#allocation2 + $0x28] sm:$0xff]
    %v29 = vld [vmem:[#allocation2 + $0x30] sm:$0xff]
    %v30 = vld [vmem:[#allocation2 + $0x38] sm:$0xff]
    %v31 = vmul.f32 %v23, %v23
    %v32 = vmul.f32 %v24, %v24
    %v33 = vmul.f32 %v25, %v25
    %v34 = vmul.f32 %v26, %v26
    %v35 = vmul.f32 %v27, %v27
    %v36 = vmul.f32 %v28, %v28
    %v37 = vmul.f32 %v29, %v29
    %v38 = vmul.f32 %v30, %v30
    %v39 = vadd.f32 %v31, %v32
    %v40 = vrot.slane %v39, 4
    %v41 = vadd.f32 %v39, %v40
    %v42 = vrot.slane %v41, 2
    %v43 = vadd.f32 %v41, %v42
    %v44 = vrot.slane %v43, 1
    %v45 = vadd.f32 %v43, %v44
    %v46 = vadd.f32 %v33, %v34
    %v47 = vrot.slane %v46, 4
    %v48 = vadd.f32 %v46, %v47
    %v49 = vrot.slane %v48, 2
    %v50 = vadd.f32 %v48, %v49
    %v51 = vrot.slane %v50, 1
    %v52 = vadd.f32 %v50, %v51
    %v53 = vadd.f32 %v35, %v36
    %v54 = vrot.slane %v53, 4
    %v55 = vadd.f32 %v53, %v54
    %v56 = vrot.slane %v55, 2
    %v57 = vadd.f32 %v55, %v56
    %v58 = vrot.slane %v57, 1
    %v59 = vadd.f32 %v57, %v58
    %v60 = vadd.f32 %v37, %v38
    %v61 = vrot.slane %v60, 4
    %v62 = vadd.f32 %v60, %v61
    %v63 = vrot.slane %v62, 2
    %v64 = vadd.f32 %v62, %v63
    %v65 = vrot.slane %v64, 1
    %v66 = vadd.f32 %v64, %v65
    %v67 = vadd.f32 %v23, %v24
    %v68 = vrot.slane %v67, 4
    %v69 = vadd.f32 %v67, %v68
    %v70 = vrot.slane %v69, 2
    %v71 = vadd.f32 %v69, %v70
    %v72 = vrot.slane %v71, 1
    %v73 = vadd.f32 %v71, %v72
    %v74 = vadd.f32 %v25, %v26
    %v75 = vrot.slane %v74, 4
    %v76 = vadd.f32 %v74, %v75
    %v77 = vrot.slane %v76, 2
    %v78 = vadd.f32 %v76, %v77
    %v79 = vrot.slane %v78, 1
    %v80 = vadd.f32 %v78, %v79
    %v81 = vadd.f32 %v27, %v28
    %v82 = vrot.slane %v81, 4
    %v83 = vadd.f32 %v81, %v82
    %v84 = vrot.slane %v83, 2
    %v85 = vadd.f32 %v83, %v84
    %v86 = vrot.slane %v85, 1
    %v87 = vadd.f32 %v85, %v86
    %v88 = vadd.f32 %v29, %v30
    %v89 = vrot.slane %v88, 4
    %v90 = vadd.f32 %v88, %v89
    %v91 = vrot.slane %v90, 2
    %v92 = vadd.f32 %v90, %v91
    %v93 = vrot.slane %v92, 1
    %v94 = vadd.f32 %v92, %v93
    %v95 = vrcp.pop %v73
    %v96 = vrcp.pop %v80
    %v97 = vrcp.pop %v87
    %v98 = vrcp.pop %v94
    %v99 = vmul.f32 %v45, %v95
    %v100 = vmul.f32 %v52, %v96
    %v101 = vmul.f32 %v59, %v97
    %v102 = vmul.f32 %v66, %v98
    %vm107 = vcmask 1041409
    %v108 = vsel %vm107, %v100, %v99
    %vm109 = vcmask 1042434
    %v110 = vsel %vm109, %v101, %v108
    %vm111 = vcmask 1043459
    %v112 = vsel %vm111, %v102, %v110
    %114 = vst [vmem:[#allocation5] sm:$0xf] %v112
    // Predicated region
    $region10: #{tpu_custom_call.1} parent=1 // pred_check
      _
    $region11: #{tpu_custom_call.1} parent=1 // pred_check_branch
      %116 = sbr.rel (0) target = $region13
    $region12: #{tpu_custom_call.1} parent=1 // pred_region
      %s118 = ssub.s32 64, 64
      %119 = vsyncadd [#allocation4], %s118
      %s121 = sshll.u32 [#allocation5], 4
      %s122 = int_to_ptr.vmem [resolvable:$true] %s121
      %124 = dma.vmem_to_hbm [thread:$0]  %s122, 64, %s1, [#allocation4]
    $region13: #{tpu_custom_call.1} parent=1 // pred_fallthru
      _
    // Predicated region
    $region14: #{tpu_custom_call.1} parent=1 // pred_check
      _
    $region15: #{tpu_custom_call.1} parent=1 // pred_check_branch
      %126 = sbr.rel (0) target = $region17
    $region16: #{tpu_custom_call.1} parent=1 // pred_region
      %127 = dma.done [#allocation4], 64
    $region17: #{tpu_custom_call.1} parent=1 // pred_fallthru
      _
    %128 = vsyncpa [#allocation3], 1
    %129 = vsyncpa [#allocation4], 1

</llo_original>
